<compile_context>
chip_gen: v7x
topology: tpu7x:2x2x1
jax: 0.10.0
libtpu: 0.0.40
codegen_flags: <defaults>
</compile_context>

<pallas_src>
import functools
import re

import jax
import jax.numpy as jnp
import numpy as np
from jax.experimental import pallas as pl
from jax.experimental.pallas import tpu as pltpu

LANE = 128
MIB = 1024 * 1024


def _round_up(x: int, m: int) -> int:
    return ((x + m - 1) // m) * m


# ---------------------------------------------------------------------------
# Per-generation tuning (VMEM budgets, megacore, preferred tile sizes).
# ---------------------------------------------------------------------------
def _tpu_generation() -> int:
    try:
        kind = jax.devices()[0].device_kind.lower()
    except Exception:
        return 0
    m = re.search(r"(\d+)", kind)
    return int(m.group(1)) if m else 0


def _tpu_config():
    gen = _tpu_generation()
    if gen >= 7:
        # v7x: 2 TensorCores/chip but only 64 MiB VMEM per TC -> tighter budgets.
        return dict(gen=gen, multi_tc=True,
                    vmem_limit=48 * MIB, fused_budget=28 * MIB,
                    tm_pref=256, tn_cands=(512, 256, 128), tk_cands=(512, 256, 128))
    if gen == 6:
        # v6e: 128 MiB VMEM, 2x256 MXU -> big tiles, generous fused budget.
        return dict(gen=gen, multi_tc=False,
                    vmem_limit=96 * MIB, fused_budget=64 * MIB,
                    tm_pref=256, tn_cands=(512, 256, 128), tk_cands=(512, 256, 128))
    if gen == 5:
        # v5e: 128 MiB VMEM, 4x128 MXU -> keep tn at 128/256, large tk still wins.
        return dict(gen=gen, multi_tc=False,
                    vmem_limit=96 * MIB, fused_budget=64 * MIB,
                    tm_pref=256, tn_cands=(256, 128), tk_cands=(512, 256, 128))
    # Unknown / older parts: conservative settings (previously validated).
    return dict(gen=gen, multi_tc=False,
                vmem_limit=32 * MIB, fused_budget=8 * MIB,
                tm_pref=128, tn_cands=(256, 128), tk_cands=(256, 128))


_CFG = _tpu_config()

# Whether pipeline_mode=pl.Buffered(1) (single-buffered constant weight blocks)
# is supported by this jax/Mosaic build.  Probed lazily on the first fused call.
_SINGLE_BUFFER_STATE = {"ok": None}


# ---------------------------------------------------------------------------
# Fused MLP kernel: all layers in one pallas_call, activations stay in VMEM/vregs.
# Per-layer padded weights are separate inputs (no common max-dim padding).
# ---------------------------------------------------------------------------
def _fused_mlp_kernel(*refs, n_layers):
    # refs = (x_ref, w_0..w_{L-1}, b_0..b_{L-1}, o_ref)
    x_ref = refs[0]
    w_refs = refs[1:1 + n_layers]
    b_refs = refs[1 + n_layers:1 + 2 * n_layers]
    o_ref = refs[1 + 2 * n_layers]

    h = x_ref[...]                                                  # (tb, Kp0) bf16
    for l in range(n_layers):
        y = jnp.dot(h, w_refs[l][...], preferred_element_type=jnp.float32)
        y = y + b_refs[l][...]                                      # (1, Np_l) f32 broadcast
        if l < n_layers - 1:
            h = jnp.maximum(y, 0.0).astype(jnp.bfloat16)            # f32 ReLU, MXU-native recast
        else:
            o_ref[...] = y.astype(o_ref.dtype)                      # emit in final dtype directly


def _fused_mlp_call(layers, x_p, *, tb, out_dtype, single_buffer_weights):
    cfg = _CFG
    Bp, Kp0 = x_p.shape
    L = len(layers)
    w_list = [w for (w, _) in layers]
    b_list = [b for (_, b) in layers]
    NpL = int(w_list[-1].shape[1])

    const_map = lambda i: (0, 0)
    # Constant index_map -> weights/bias DMA'd once; ask for single-buffering so
    # the resident footprint is 1x, not 2x (matters most on v7x's 64 MiB VMEM).
    spec_kwargs = {"pipeline_mode": pl.Buffered(1)} if single_buffer_weights else {}
    w_specs = [pl.BlockSpec(tuple(w.shape), const_map, **spec_kwargs) for w in w_list]
    b_specs = [pl.BlockSpec(tuple(b.shape), const_map, **spec_kwargs) for b in b_list]

    out_isz = np.dtype(out_dtype).itemsize
    flops = 2 * Bp * sum(int(w.shape[0]) * int(w.shape[1]) for w in w_list)
    bytes_accessed = (int(x_p.size) * 2
                      + sum(int(w.size) * 2 for w in w_list)
                      + sum(int(b.size) * 4 for b in b_list)
                      + Bp * NpL * out_isz)

    return pl.pallas_call(
        functools.partial(_fused_mlp_kernel, n_layers=L),
        out_shape=jax.ShapeDtypeStruct((Bp, NpL), out_dtype),
        grid_spec=pltpu.PrefetchScalarGridSpec(
            num_scalar_prefetch=0,
            grid=(Bp // tb,),
            in_specs=[pl.BlockSpec((tb, Kp0), lambda i: (i, 0))] + w_specs + b_specs,
            out_specs=pl.BlockSpec((tb, NpL), lambda i: (i, 0)),
        ),
        compiler_params=pltpu.CompilerParams(
            dimension_semantics=("parallel",),
            vmem_limit_bytes=cfg["vmem_limit"],
        ),
        cost_estimate=pl.CostEstimate(flops=int(flops), transcendentals=0,
                                      bytes_accessed=int(bytes_accessed)),
    )(x_p, *w_list, *b_list)


def _fused_footprint_bytes(layers, tb, out_itemsize):
    """Conservative fused VMEM estimate: double-buffered weights/bias (even though
    we request single-buffering), double-buffered x/out blocks, f32 intermediates."""
    w_bytes = sum(int(w.size) * 2 for (w, _) in layers)
    b_bytes = sum(int(b.size) * 4 for (_, b) in layers)
    kp0 = int(layers[0][0].shape[0])
    npl = int(layers[-1][0].shape[1])
    dmax = max(max(int(d) for d in w.shape) for (w, _) in layers)
    act_bytes = 2 * tb * kp0 * 2 + 2 * tb * npl * out_itemsize + 2 * tb * dmax * 4
    return 2 * (w_bytes + b_bytes) + act_bytes


# ---------------------------------------------------------------------------
# Tiled (tm, tn, tk) linear kernel: large-layer fallback with bounded VMEM.
# Operates on padded bf16 activations; hidden layers emit bf16, final layer
# emits the caller dtype, so activations never round-trip HBM in f32.
# ---------------------------------------------------------------------------
def _linear_tiled_kernel(x_ref, w_ref, b_ref, o_ref, acc_ref, *, apply_relu):
    k = pl.program_id(2)

    @pl.when(k == 0)
    def _():
        acc_ref[...] = jnp.zeros_like(acc_ref)

    acc_ref[...] += jnp.dot(x_ref[...], w_ref[...], preferred_element_type=jnp.float32)

    @pl.when(k == pl.num_programs(2) - 1)
    def _():
        y = acc_ref[...] + b_ref[...]        # bias broadcast only at the last K step
        if apply_relu:
            y = jnp.maximum(y, 0.0)
        o_ref[...] = y.astype(o_ref.dtype)


def _pick_tile(dim, candidates):
    for c in candidates:
        if dim % c == 0:
            return c
    return 128


def _linear_tiled_call(x_p, w_p, b_p, *, apply_relu, out_dtype, tm):
    cfg = _CFG
    Bp, Kp = x_p.shape
    Kp2, Np = w_p.shape
    assert Kp == Kp2
    tn = _pick_tile(Np, cfg["tn_cands"])
    tk = _pick_tile(Kp, cfg["tk_cands"])

    out_isz = np.dtype(out_dtype).itemsize
    flops = 2 * Bp * Kp * Np
    bytes_accessed = (int(x_p.size) * 2 + int(w_p.size) * 2 + int(b_p.size) * 4
                      + Bp * Np * out_isz)

    return pl.pallas_call(
        functools.partial(_linear_tiled_kernel, apply_relu=apply_relu),
        out_shape=jax.ShapeDtypeStruct((Bp, Np), out_dtype),
        grid_spec=pltpu.PrefetchScalarGridSpec(
            num_scalar_prefetch=0,
            grid=(Bp // tm, Np // tn, Kp // tk),
            in_specs=[
                pl.BlockSpec((tm, tk), lambda i, j, k: (i, k)),
                pl.BlockSpec((tk, tn), lambda i, j, k: (k, j)),
                pl.BlockSpec((1, tn), lambda i, j, k: (0, j)),
            ],
            out_specs=pl.BlockSpec((tm, tn), lambda i, j, k: (i, j)),
            scratch_shapes=[pltpu.VMEM((tm, tn), jnp.float32)],
        ),
        compiler_params=pltpu.CompilerParams(
            dimension_semantics=("parallel", "parallel", "arbitrary"),
            vmem_limit_bytes=cfg["vmem_limit"],
        ),
        cost_estimate=pl.CostEstimate(flops=int(flops), transcendentals=0,
                                      bytes_accessed=int(bytes_accessed)),
    )(x_p, w_p, b_p)


# ---------------------------------------------------------------------------
# Forward pass
# ---------------------------------------------------------------------------
def prepare_mlp_params(params):
    """Pad/cast each layer ONCE (hoisted out of the per-call path).

    Per-layer padding to (round_up(din,128), round_up(dout,128)); padded weight
    rows/cols and bias lanes are zero, so padded lanes stay exactly zero through
    matmul + bias + ReLU and are sliced off at the end."""
    layers = []
    for (w, b) in params:
        din, dout = int(w.shape[0]), int(w.shape[1])
        kp, np_pad = _round_up(din, LANE), _round_up(dout, LANE)
        w_p = jnp.zeros((kp, np_pad), jnp.bfloat16).at[:din, :dout].set(w.astype(jnp.bfloat16))
        b_p = jnp.zeros((1, np_pad), jnp.float32).at[0, :dout].set(b.astype(jnp.float32))
        layers.append((w_p, b_p))
    return layers


def make_mlp_forward(params, *, force_tiled=False):
    """Prepare padded weights once and return a forward callable."""
    cfg = _CFG
    layers = prepare_mlp_params(params)
    L = len(layers)
    din = int(params[0][0].shape[0])
    dout = int(params[-1][0].shape[1])
    kp0 = int(layers[0][0].shape[0])

    def forward(x):
        B = x.shape[0]
        assert x.shape[1] == din
        out_dtype = x.dtype

        # Batch tile: >=128 for large batches (MXU M-utilization, fewer grid
        # steps / DMAs); tiny batches stay at a 16-row sublane-aligned tile.
        tb = max(16, min(256, _round_up(B, 16)))

        if (not force_tiled) and (
            _fused_footprint_bytes(layers, tb, np.dtype(out_dtype).itemsize)
            <= cfg["fused_budget"]
        ):
            Bp = _round_up(B, tb)
            if cfg["multi_tc"]:
                # grid >= 2 only where it buys core-sharding (v7x's 2 TCs).
                Bp = max(Bp, 2 * tb)
            x_p = jnp.zeros((Bp, kp0), jnp.bfloat16).at[:B, :din].set(
                x.astype(jnp.bfloat16))

            state = _SINGLE_BUFFER_STATE
            if state["ok"] is None:
                try:
                    out_p = _fused_mlp_call(layers, x_p, tb=tb, out_dtype=out_dtype,
                                            single_buffer_weights=True)
                    state["ok"] = True
                except Exception:
                    # This jax build rejects pipeline_mode=pl.Buffered(1);
                    # fall back to default double-buffering (still correct).
                    state["ok"] = False
                    out_p = _fused_mlp_call(layers, x_p, tb=tb, out_dtype=out_dtype,
                                            single_buffer_weights=False)
            else:
                out_p = _fused_mlp_call(layers, x_p, tb=tb, out_dtype=out_dtype,
                                        single_buffer_weights=state["ok"])
            return out_p[:B, :dout]

        # Tiled fallback: padded bf16 activations stay padded between layers.
        tm = max(16, min(cfg["tm_pref"], _round_up(B, 16)))
        Bp = _round_up(B, tm)
        h_p = jnp.zeros((Bp, kp0), jnp.bfloat16).at[:B, :din].set(
            x.astype(jnp.bfloat16))
        for l, (w_p, b_p) in enumerate(layers):
            last = (l == L - 1)
            h_p = _linear_tiled_call(h_p, w_p, b_p,
                                     apply_relu=not last,
                                     out_dtype=(out_dtype if last else jnp.bfloat16),
                                     tm=tm)
        return h_p[:B, :dout]

    return forward


def mlp_forward(params, x, *, force_tiled=False):
    """Convenience wrapper (re-prepares weights each call; prefer make_mlp_forward)."""
    return make_mlp_forward(params, force_tiled=force_tiled)(x)


def init_mlp_params(key, input_dim, hidden_dims, output_dim, dtype=jnp.float32):
    """Deterministic init mimicking torch.nn.Linear default U(-1/sqrt(fan_in), +)."""
    dims = [input_dim] + list(hidden_dims) + [output_dim]
    params = []
    for i in range(len(dims) - 1):
        fan_in, fan_out = dims[i], dims[i + 1]
        key, kw, kb = jax.random.split(key, 3)
        bound = 1.0 / jnp.sqrt(fan_in)
        w = jax.random.uniform(kw, (fan_in, fan_out), dtype, -bound, bound)
        b = jax.random.uniform(kb, (fan_out,), dtype, -bound, bound)
        params.append((w, b))
    return params


def mlp_forward_ref(params, x):
    """Pure-JAX reference matching the kernel numerics (bf16 matmul, f32 accumulate,
    bf16 hidden activations). Hidden layers get ReLU; final Linear does not."""
    n = len(params)
    h = x.astype(jnp.bfloat16)
    out = None
    for i, (w, b) in enumerate(params):
        y = jnp.dot(h, w.astype(jnp.bfloat16), preferred_element_type=jnp.float32)
        y = y + b.astype(jnp.float32)
        if i < n - 1:
            h = jnp.maximum(y, 0.0).astype(jnp.bfloat16)
        else:
            out = y
    return out.astype(x.dtype)


if __name__ == "__main__":
    key = jax.random.PRNGKey(0)
    kp1, kx1, kp2, kx2 = jax.random.split(key, 4)

    # --- fused single-call path (small MLP head) ---
    batch, input_dim, hidden_dims, output_dim = 8, 32, [64, 64], 16
    params = init_mlp_params(kp1, input_dim, hidden_dims, output_dim)
    fwd = make_mlp_forward(params)
    x = jax.random.normal(kx1, (batch, input_dim), jnp.float32)
    out = jax.block_until_ready(fwd(x))
    assert out.shape == (batch, output_dim)
    ref = mlp_forward_ref(params, x)
    assert jnp.allclose(out, ref, atol=2e-2, rtol=2e-2), "fused MLP mismatch vs reference"

    # --- tiled fallback path (forced; exercises the padded bf16 inter-layer chain) ---
    batch2, input_dim2, hidden_dims2, output_dim2 = 40, 200, [192], 24
    params2 = init_mlp_params(kp2, input_dim2, hidden_dims2, output_dim2)
    fwd2 = make_mlp_forward(params2, force_tiled=True)
    x2 = jax.random.normal(kx2, (batch2, input_dim2), jnp.float32)
    out2 = jax.block_until_ready(fwd2(x2))
    assert out2.shape == (batch2, output_dim2)
    ref2 = mlp_forward_ref(params2, x2)
    assert jnp.allclose(out2, ref2, atol=2e-2, rtol=2e-2), "tiled MLP mismatch vs reference"

    print("KERNEL_OK")
</pallas_src>

<mosaic_0001>
module attributes {stable_mosaic.version = 11 : i64} {
  func.func @_fused_mlp_kernel(%arg0: i32, %arg1: memref<16x128xbf16, #tpu.memory_space<vmem>>, %arg2: memref<128x128xbf16, #tpu.memory_space<vmem>>, %arg3: memref<128x128xbf16, #tpu.memory_space<vmem>>, %arg4: memref<128x128xbf16, #tpu.memory_space<vmem>>, %arg5: memref<1x128xf32, #tpu.memory_space<vmem>>, %arg6: memref<1x128xf32, #tpu.memory_space<vmem>>, %arg7: memref<1x128xf32, #tpu.memory_space<vmem>>, %arg8: memref<16x128xf32, #tpu.memory_space<vmem>>) attributes {dimension_semantics = [#tpu.dimension_semantics<parallel>], iteration_bounds = array<i64: 1>, scalar_prefetch = 0 : i64, scratch_operands = 0 : i64, tpu.core_type = #tpu.core_type<tc>, window_params = [{transform_indices = @transform_0, window_bounds = array<i64: 16, 128>}, {pipeline_mode = #tpu.pipeline_mode<synchronous>, transform_indices = @transform_1, window_bounds = array<i64: 128, 128>}, {pipeline_mode = #tpu.pipeline_mode<synchronous>, transform_indices = @transform_2, window_bounds = array<i64: 128, 128>}, {pipeline_mode = #tpu.pipeline_mode<synchronous>, transform_indices = @transform_3, window_bounds = array<i64: 128, 128>}, {pipeline_mode = #tpu.pipeline_mode<synchronous>, transform_indices = @transform_4, window_bounds = array<i64: 1, 128>}, {pipeline_mode = #tpu.pipeline_mode<synchronous>, transform_indices = @transform_5, window_bounds = array<i64: 1, 128>}, {pipeline_mode = #tpu.pipeline_mode<synchronous>, transform_indices = @transform_6, window_bounds = array<i64: 1, 128>}, {transform_indices = @transform_7, window_bounds = array<i64: 16, 128>}]} {
    %c0 = arith.constant 0 : index
    %c0_0 = arith.constant 0 : index
    %0 = vector.load %arg1[%c0, %c0_0] : memref<16x128xbf16, #tpu.memory_space<vmem>>, vector<16x128xbf16>
    %c0_1 = arith.constant 0 : index
    %c0_2 = arith.constant 0 : index
    %1 = vector.load %arg2[%c0_1, %c0_2] : memref<128x128xbf16, #tpu.memory_space<vmem>>, vector<128x128xbf16>
    %cst = arith.constant dense<0.000000e+00> : vector<16x128xf32>
    %2 = tpu.matmul %0, %1, %cst {dimension_numbers = #tpu.dot_dimension_numbers<[1], [0], [0], [1], [0, 0, 1, 1], [], []>} : vector<16x128xbf16>, vector<128x128xbf16>, vector<16x128xf32> -> vector<16x128xf32>
    %c0_3 = arith.constant 0 : index
    %c0_4 = arith.constant 0 : index
    %3 = vector.load %arg5[%c0_3, %c0_4] : memref<1x128xf32, #tpu.memory_space<vmem>>, vector<1x128xf32>
    %4 = vector.broadcast %3 : vector<1x128xf32> to vector<16x128xf32>
    %5 = arith.addf %2, %4 : vector<16x128xf32>
    %cst_5 = arith.constant 0.000000e+00 : f32
    %6 = vector.broadcast %cst_5 : f32 to vector<16x128xf32>
    %7 = arith.maximumf %5, %6 : vector<16x128xf32>
    %8 = arith.truncf %7 : vector<16x128xf32> to vector<16x128xbf16>
    %c0_6 = arith.constant 0 : index
    %c0_7 = arith.constant 0 : index
    %9 = vector.load %arg3[%c0_6, %c0_7] : memref<128x128xbf16, #tpu.memory_space<vmem>>, vector<128x128xbf16>
    %cst_8 = arith.constant dense<0.000000e+00> : vector<16x128xf32>
    %10 = tpu.matmul %8, %9, %cst_8 {dimension_numbers = #tpu.dot_dimension_numbers<[1], [0], [0], [1], [0, 0, 1, 1], [], []>} : vector<16x128xbf16>, vector<128x128xbf16>, vector<16x128xf32> -> vector<16x128xf32>
    %c0_9 = arith.constant 0 : index
    %c0_10 = arith.constant 0 : index
    %11 = vector.load %arg6[%c0_9, %c0_10] : memref<1x128xf32, #tpu.memory_space<vmem>>, vector<1x128xf32>
    %12 = vector.broadcast %11 : vector<1x128xf32> to vector<16x128xf32>
    %13 = arith.addf %10, %12 : vector<16x128xf32>
    %cst_11 = arith.constant 0.000000e+00 : f32
    %14 = vector.broadcast %cst_11 : f32 to vector<16x128xf32>
    %15 = arith.maximumf %13, %14 : vector<16x128xf32>
    %16 = arith.truncf %15 : vector<16x128xf32> to vector<16x128xbf16>
    %c0_12 = arith.constant 0 : index
    %c0_13 = arith.constant 0 : index
    %17 = vector.load %arg4[%c0_12, %c0_13] : memref<128x128xbf16, #tpu.memory_space<vmem>>, vector<128x128xbf16>
    %cst_14 = arith.constant dense<0.000000e+00> : vector<16x128xf32>
    %18 = tpu.matmul %16, %17, %cst_14 {dimension_numbers = #tpu.dot_dimension_numbers<[1], [0], [0], [1], [0, 0, 1, 1], [], []>} : vector<16x128xbf16>, vector<128x128xbf16>, vector<16x128xf32> -> vector<16x128xf32>
    %c0_15 = arith.constant 0 : index
    %c0_16 = arith.constant 0 : index
    %19 = vector.load %arg7[%c0_15, %c0_16] : memref<1x128xf32, #tpu.memory_space<vmem>>, vector<1x128xf32>
    %20 = vector.broadcast %19 : vector<1x128xf32> to vector<16x128xf32>
    %21 = arith.addf %18, %20 : vector<16x128xf32>
    %c0_17 = arith.constant 0 : index
    %c0_18 = arith.constant 0 : index
    %22 = vector.load %arg8[%c0_17, %c0_18] : memref<16x128xf32, #tpu.memory_space<vmem>>, vector<16x128xf32>
    tpu.vector_store %arg8[%c0_17, %c0_18], %21 {strides = array<i32>} : memref<16x128xf32, #tpu.memory_space<vmem>>, vector<16x128xf32>,
    return
  }
  func.func @transform_0(%arg0: i32) -> (i32, i32) {
    %c0_i32 = arith.constant 0 : i32
    %c0_i32_0 = arith.constant 0 : i32
    return %arg0, %c0_i32 : i32, i32
  }
  func.func @transform_1(%arg0: i32) -> (i32, i32) {
    %c0_i32 = arith.constant 0 : i32
    %c0_i32_0 = arith.constant 0 : i32
    %c0_i32_1 = arith.constant 0 : i32
    return %c0_i32, %c0_i32_0 : i32, i32
  }
  func.func @transform_2(%arg0: i32) -> (i32, i32) {
    %c0_i32 = arith.constant 0 : i32
    %c0_i32_0 = arith.constant 0 : i32
    %c0_i32_1 = arith.constant 0 : i32
    return %c0_i32, %c0_i32_0 : i32, i32
  }
  func.func @transform_3(%arg0: i32) -> (i32, i32) {
    %c0_i32 = arith.constant 0 : i32
    %c0_i32_0 = arith.constant 0 : i32
    %c0_i32_1 = arith.constant 0 : i32
    return %c0_i32, %c0_i32_0 : i32, i32
  }
  func.func @transform_4(%arg0: i32) -> (i32, i32) {
    %c0_i32 = arith.constant 0 : i32
    %c0_i32_0 = arith.constant 0 : i32
    %c0_i32_1 = arith.constant 0 : i32
    return %c0_i32, %c0_i32_0 : i32, i32
  }
  func.func @transform_5(%arg0: i32) -> (i32, i32) {
    %c0_i32 = arith.constant 0 : i32
    %c0_i32_0 = arith.constant 0 : i32
    %c0_i32_1 = arith.constant 0 : i32
    return %c0_i32, %c0_i32_0 : i32, i32
  }
  func.func @transform_6(%arg0: i32) -> (i32, i32) {
    %c0_i32 = arith.constant 0 : i32
    %c0_i32_0 = arith.constant 0 : i32
    %c0_i32_1 = arith.constant 0 : i32
    return %c0_i32, %c0_i32_0 : i32, i32
  }
  func.func @transform_7(%arg0: i32) -> (i32, i32) {
    %c0_i32 = arith.constant 0 : i32
    %c0_i32_0 = arith.constant 0 : i32
    return %arg0, %c0_i32 : i32, i32
  }
}

module attributes {stable_mosaic.version = 11 : i64} {
  func.func @_fused_mlp_kernel(%arg0: i32, %arg1: memref<16x128xbf16, #tpu.memory_space<vmem>>, %arg2: memref<128x128xbf16, #tpu.memory_space<vmem>>, %arg3: memref<128x128xbf16, #tpu.memory_space<vmem>>, %arg4: memref<128x128xbf16, #tpu.memory_space<vmem>>, %arg5: memref<1x128xf32, #tpu.memory_space<vmem>>, %arg6: memref<1x128xf32, #tpu.memory_space<vmem>>, %arg7: memref<1x128xf32, #tpu.memory_space<vmem>>, %arg8: memref<16x128xf32, #tpu.memory_space<vmem>>) attributes {dimension_semantics = [#tpu.dimension_semantics<parallel>], iteration_bounds = array<i64: 1>, scalar_prefetch = 0 : i64, scratch_operands = 0 : i64, tpu.core_type = #tpu.core_type<tc>, window_params = [{transform_indices = @transform_0, window_bounds = array<i64: 16, 128>}, {pipeline_mode = #tpu.pipeline_mode<synchronous>, transform_indices = @transform_1, window_bounds = array<i64: 128, 128>}, {pipeline_mode = #tpu.pipeline_mode<synchronous>, transform_indices = @transform_2, window_bounds = array<i64: 128, 128>}, {pipeline_mode = #tpu.pipeline_mode<synchronous>, transform_indices = @transform_3, window_bounds = array<i64: 128, 128>}, {pipeline_mode = #tpu.pipeline_mode<synchronous>, transform_indices = @transform_4, window_bounds = array<i64: 1, 128>}, {pipeline_mode = #tpu.pipeline_mode<synchronous>, transform_indices = @transform_5, window_bounds = array<i64: 1, 128>}, {pipeline_mode = #tpu.pipeline_mode<synchronous>, transform_indices = @transform_6, window_bounds = array<i64: 1, 128>}, {transform_indices = @transform_7, window_bounds = array<i64: 16, 128>}]} {
    %c0 = arith.constant 0 : index
    %c0_0 = arith.constant 0 : index
    %0 = vector.load %arg1[%c0, %c0_0] : memref<16x128xbf16, #tpu.memory_space<vmem>>, vector<16x128xbf16>
    %c0_1 = arith.constant 0 : index
    %c0_2 = arith.constant 0 : index
    %1 = vector.load %arg2[%c0_1, %c0_2] : memref<128x128xbf16, #tpu.memory_space<vmem>>, vector<128x128xbf16>
    %cst = arith.constant dense<0.000000e+00> : vector<16x128xf32>
    %2 = tpu.matmul %0, %1, %cst {dimension_numbers = #tpu.dot_dimension_numbers<[1], [0], [0], [1], [0, 0, 1, 1], [], []>} : vector<16x128xbf16>, vector<128x128xbf16>, vector<16x128xf32> -> vector<16x128xf32>
    %c0_3 = arith.constant 0 : index
    %c0_4 = arith.constant 0 : index
    %3 = vector.load %arg5[%c0_3, %c0_4] : memref<1x128xf32, #tpu.memory_space<vmem>>, vector<1x128xf32>
    %4 = vector.broadcast %3 : vector<1x128xf32> to vector<16x128xf32>
    %5 = arith.addf %2, %4 : vector<16x128xf32>
    %cst_5 = arith.constant 0.000000e+00 : f32
    %6 = vector.broadcast %cst_5 : f32 to vector<16x128xf32>
    %7 = arith.maximumf %5, %6 : vector<16x128xf32>
    %8 = arith.truncf %7 : vector<16x128xf32> to vector<16x128xbf16>
    %c0_6 = arith.constant 0 : index
    %c0_7 = arith.constant 0 : index
    %9 = vector.load %arg3[%c0_6, %c0_7] : memref<128x128xbf16, #tpu.memory_space<vmem>>, vector<128x128xbf16>
    %cst_8 = arith.constant dense<0.000000e+00> : vector<16x128xf32>
    %10 = tpu.matmul %8, %9, %cst_8 {dimension_numbers = #tpu.dot_dimension_numbers<[1], [0], [0], [1], [0, 0, 1, 1], [], []>} : vector<16x128xbf16>, vector<128x128xbf16>, vector<16x128xf32> -> vector<16x128xf32>
    %c0_9 = arith.constant 0 : index
    %c0_10 = arith.constant 0 : index
    %11 = vector.load %arg6[%c0_9, %c0_10] : memref<1x128xf32, #tpu.memory_space<vmem>>, vector<1x128xf32>
    %12 = vector.broadcast %11 : vector<1x128xf32> to vector<16x128xf32>
    %13 = arith.addf %10, %12 : vector<16x128xf32>
    %cst_11 = arith.constant 0.000000e+00 : f32
    %14 = vector.broadcast %cst_11 : f32 to vector<16x128xf32>
    %15 = arith.maximumf %13, %14 : vector<16x128xf32>
    %16 = arith.truncf %15 : vector<16x128xf32> to vector<16x128xbf16>
    %c0_12 = arith.constant 0 : index
    %c0_13 = arith.constant 0 : index
    %17 = vector.load %arg4[%c0_12, %c0_13] : memref<128x128xbf16, #tpu.memory_space<vmem>>, vector<128x128xbf16>
    %cst_14 = arith.constant dense<0.000000e+00> : vector<16x128xf32>
    %18 = tpu.matmul %16, %17, %cst_14 {dimension_numbers = #tpu.dot_dimension_numbers<[1], [0], [0], [1], [0, 0, 1, 1], [], []>} : vector<16x128xbf16>, vector<128x128xbf16>, vector<16x128xf32> -> vector<16x128xf32>
    %c0_15 = arith.constant 0 : index
    %c0_16 = arith.constant 0 : index
    %19 = vector.load %arg7[%c0_15, %c0_16] : memref<1x128xf32, #tpu.memory_space<vmem>>, vector<1x128xf32>
    %20 = vector.broadcast %19 : vector<1x128xf32> to vector<16x128xf32>
    %21 = arith.addf %18, %20 : vector<16x128xf32>
    %c0_17 = arith.constant 0 : index
    %c0_18 = arith.constant 0 : index
    %22 = vector.load %arg8[%c0_17, %c0_18] : memref<16x128xf32, #tpu.memory_space<vmem>>, vector<16x128xf32>
    tpu.vector_store %arg8[%c0_17, %c0_18], %21 {strides = array<i32>} : memref<16x128xf32, #tpu.memory_space<vmem>>, vector<16x128xf32>,
    return
  }
  func.func @transform_0(%arg0: i32) -> (i32, i32) {
    %c0_i32 = arith.constant 0 : i32
    %c0_i32_0 = arith.constant 0 : i32
    return %arg0, %c0_i32 : i32, i32
  }
  func.func @transform_1(%arg0: i32) -> (i32, i32) {
    %c0_i32 = arith.constant 0 : i32
    %c0_i32_0 = arith.constant 0 : i32
    %c0_i32_1 = arith.constant 0 : i32
    return %c0_i32, %c0_i32_0 : i32, i32
  }
  func.func @transform_2(%arg0: i32) -> (i32, i32) {
    %c0_i32 = arith.constant 0 : i32
    %c0_i32_0 = arith.constant 0 : i32
    %c0_i32_1 = arith.constant 0 : i32
    return %c0_i32, %c0_i32_0 : i32, i32
  }
  func.func @transform_3(%arg0: i32) -> (i32, i32) {
    %c0_i32 = arith.constant 0 : i32
    %c0_i32_0 = arith.constant 0 : i32
    %c0_i32_1 = arith.constant 0 : i32
    return %c0_i32, %c0_i32_0 : i32, i32
  }
  func.func @transform_4(%arg0: i32) -> (i32, i32) {
    %c0_i32 = arith.constant 0 : i32
    %c0_i32_0 = arith.constant 0 : i32
    %c0_i32_1 = arith.constant 0 : i32
    return %c0_i32, %c0_i32_0 : i32, i32
  }
  func.func @transform_5(%arg0: i32) -> (i32, i32) {
    %c0_i32 = arith.constant 0 : i32
    %c0_i32_0 = arith.constant 0 : i32
    %c0_i32_1 = arith.constant 0 : i32
    return %c0_i32, %c0_i32_0 : i32, i32
  }
  func.func @transform_6(%arg0: i32) -> (i32, i32) {
    %c0_i32 = arith.constant 0 : i32
    %c0_i32_0 = arith.constant 0 : i32
    %c0_i32_1 = arith.constant 0 : i32
    return %c0_i32, %c0_i32_0 : i32, i32
  }
  func.func @transform_7(%arg0: i32) -> (i32, i32) {
    %c0_i32 = arith.constant 0 : i32
    %c0_i32_0 = arith.constant 0 : i32
    return %arg0, %c0_i32 : i32, i32
  }
}

</mosaic_0001>

<llo_original>
// kernel: tpu_custom_call.1
$region0: #{tpu_custom_call.1}
  #allocation0 [shape = 'u32[]', space=smem, size = 0x4, offset = 0x4, fixed_abs, tag = 'smem constant byte address 0x4 - core index']
  #allocation1 [shape = 'u32[144,128]{1,0:T(1,128)}', space=vmem, size = 0x12000, scoped, tag = 'internal scratch']
  %s0 = inlined_call_operand.hbm [shape: bf16[16,128], index: 0, kind: input, shape index: {}]
  %s1 = inlined_call_operand.hbm [shape: bf16[128,128], index: 1, kind: input, shape index: {}]
  %s2 = inlined_call_operand.hbm [shape: bf16[128,128], index: 2, kind: input, shape index: {}]
  %s3 = inlined_call_operand.hbm [shape: bf16[128,128], index: 3, kind: input, shape index: {}]
  %s4 = inlined_call_operand.vmem [shape: f32[1,128], index: 4, kind: input, shape index: {}]
  %s5 = inlined_call_operand.vmem [shape: f32[1,128], index: 5, kind: input, shape index: {}]
  %s6 = inlined_call_operand.vmem [shape: f32[1,128], index: 6, kind: input, shape index: {}]
  %s7 = inlined_call_operand.hbm [shape: f32[16,128], index: 7, kind: output, shape index: {}]
  %s8 = sld [smem:[#allocation0]]
  $region54: #{tpu_custom_call.1} parent=0
    _
  %s10 = ssub.s32 1, %s8
  %s11 = scalar_select 0, %s10, %s8
  $region1: #{tpu_custom_call.1} parent=0
    #allocation2 [shape = 'u8[4096]{0}', space=vmem, size = 0x1000, scoped, tag = 'input window, operand 0, single buffered']
    #allocation3 [shape = 's32[1]{0}', space=sflag, size = 0x4, scoped, tag = 'scoped memory for tpu_custom_call.1']
    #allocation4 [shape = 's32[1]{0}', space=sflag, size = 0x4, scoped, tag = 'scoped memory for tpu_custom_call.1']
    #allocation5 [shape = 'u8[32768]{0}', space=vmem, size = 0x8000, scoped, tag = 'input window, operand 1, single buffered']
    #allocation6 [shape = 's32[1]{0}', space=sflag, size = 0x4, scoped, tag = 'scoped memory for tpu_custom_call.1']
    #allocation7 [shape = 'u8[32768]{0}', space=vmem, size = 0x8000, scoped, tag = 'input window, operand 2, single buffered']
    #allocation8 [shape = 'u8[32768]{0}', space=vmem, size = 0x8000, scoped, tag = 'input window, operand 3, single buffered']
    #allocation9 [shape = 's32[1]{0}', space=sflag, size = 0x4, scoped, tag = 'scoped memory for tpu_custom_call.1']
    #allocation10 [shape = 'u8[8192]{0}', space=vmem, size = 0x2000, scoped, tag = 'output window, operand 0, single buffered']
    %12 = vsyncpa [#allocation3], 0
    %13 = vsyncpa [#allocation6], 0
    %14 = vsyncpa [#allocation9], 0
    %15 = vsyncpa [#allocation4], 0
    // Predicated region
    $region2: #{tpu_custom_call.1} parent=1 // pred_check
      _
    $region3: #{tpu_custom_call.1} parent=1 // pred_check_branch
      %17 = sbr.rel (0) target = $region5
    $region4: #{tpu_custom_call.1} parent=1 // pred_region
      %s19 = ssub.s32 128, 128
      %20 = vsyncadd [#allocation3], %s19
      %s21 = sshll.u32 [#allocation2], 4
      %s22 = int_to_ptr.vmem [resolvable:$true] %s21
      %27 = dma.hbm_to_vmem [thread:$0]  %s0, 128, %s22, [#allocation3], 64, 64, 4
    $region5: #{tpu_custom_call.1} parent=1 // pred_fallthru
      _
    // Predicated region
    $region6: #{tpu_custom_call.1} parent=1 // pred_check
      _
    $region7: #{tpu_custom_call.1} parent=1 // pred_check_branch
      %29 = sbr.rel (0) target = $region9
    $region8: #{tpu_custom_call.1} parent=1 // pred_region
      %s31 = ssub.s32 1024, 1024
      %32 = vsyncadd [#allocation6], %s31
      %s33 = sshll.u32 [#allocation5], 4
      %s34 = int_to_ptr.vmem [resolvable:$true] %s33
      %39 = dma.hbm_to_vmem [thread:$0]  %s1, 1024, %s34, [#allocation6], 64, 64, 4
    $region9: #{tpu_custom_call.1} parent=1 // pred_fallthru
      _
    // Predicated region
    $region10: #{tpu_custom_call.1} parent=1 // pred_check
      _
    $region11: #{tpu_custom_call.1} parent=1 // pred_check_branch
      %41 = sbr.rel (0) target = $region13
    $region12: #{tpu_custom_call.1} parent=1 // pred_region
      %s43 = ssub.s32 1024, 1024
      %44 = vsyncadd [#allocation6], %s43
      %s45 = sshll.u32 [#allocation7], 4
      %s46 = int_to_ptr.vmem [resolvable:$true] %s45
      %51 = dma.hbm_to_vmem [thread:$0]  %s2, 1024, %s46, [#allocation6], 64, 64, 4
    $region13: #{tpu_custom_call.1} parent=1 // pred_fallthru
      _
    // Predicated region
    $region14: #{tpu_custom_call.1} parent=1 // pred_check
      _
    $region15: #{tpu_custom_call.1} parent=1 // pred_check_branch
      %53 = sbr.rel (0) target = $region17
    $region16: #{tpu_custom_call.1} parent=1 // pred_region
      %s55 = ssub.s32 1024, 1024
      %56 = vsyncadd [#allocation9], %s55
      %s57 = sshll.u32 [#allocation8], 4
      %s58 = int_to_ptr.vmem [resolvable:$true] %s57
      %63 = dma.hbm_to_vmem [thread:$0]  %s3, 1024, %s58, [#allocation9], 64, 64, 4
    $region17: #{tpu_custom_call.1} parent=1 // pred_fallthru
      _
    // Predicated region
    $region18: #{tpu_custom_call.1} parent=1 // pred_check
      _
    $region19: #{tpu_custom_call.1} parent=1 // pred_check_branch
      %65 = sbr.rel (0) target = $region21
    $region20: #{tpu_custom_call.1} parent=1 // pred_region
      _
    $region21: #{tpu_custom_call.1} parent=1 // pred_fallthru
      _
    // Predicated region
    $region22: #{tpu_custom_call.1} parent=1 // pred_check
      _
    $region23: #{tpu_custom_call.1} parent=1 // pred_check_branch
      %67 = sbr.rel (0) target = $region25
    $region24: #{tpu_custom_call.1} parent=1 // pred_region
      _
    $region25: #{tpu_custom_call.1} parent=1 // pred_fallthru
      _
    // Predicated region
    $region26: #{tpu_custom_call.1} parent=1 // pred_check
      _
    $region27: #{tpu_custom_call.1} parent=1 // pred_check_branch
      %69 = sbr.rel (0) target = $region29
    $region28: #{tpu_custom_call.1} parent=1 // pred_region
      _
    $region29: #{tpu_custom_call.1} parent=1 // pred_fallthru
      _
    // Predicated region
    $region30: #{tpu_custom_call.1} parent=1 // pred_check
      _
    $region31: #{tpu_custom_call.1} parent=1 // pred_check_branch
      %71 = sbr.rel (0) target = $region33
    $region32: #{tpu_custom_call.1} parent=1 // pred_region
      %72 = dma.done [#allocation3], 128
    $region33: #{tpu_custom_call.1} parent=1 // pred_fallthru
      _
    // Predicated region
    $region34: #{tpu_custom_call.1} parent=1 // pred_check
      _
    $region35: #{tpu_custom_call.1} parent=1 // pred_check_branch
      %74 = sbr.rel (0) target = $region37
    $region36: #{tpu_custom_call.1} parent=1 // pred_region
      %75 = dma.done [#allocation6], 1024
    $region37: #{tpu_custom_call.1} parent=1 // pred_fallthru
      _
    // Predicated region
    $region38: #{tpu_custom_call.1} parent=1 // pred_check
      _
    $region39: #{tpu_custom_call.1} parent=1 // pred_check_branch
      %77 = sbr.rel (0) target = $region41
    $region40: #{tpu_custom_call.1} parent=1 // pred_region
      %78 = dma.done [#allocation6], 1024
    $region41: #{tpu_custom_call.1} parent=1 // pred_fallthru
      _
    // Predicated region
    $region42: #{tpu_custom_call.1} parent=1 // pred_check
      _
    $region43: #{tpu_custom_call.1} parent=1 // pred_check_branch
      %80 = sbr.rel (0) target = $region45
    $region44: #{tpu_custom_call.1} parent=1 // pred_region
      %81 = dma.done [#allocation9], 1024
    $region45: #{tpu_custom_call.1} parent=1 // pred_fallthru
      _
    %v83 = vld [vmem:[#allocation2] sm:$0xf]
    %v84 = vld [vmem:[#allocation2 + $0x4] sm:$0xf]
    %v85 = vld [vmem:[#allocation5] sm:$0xf]
    %v86 = vld [vmem:[#allocation5 + $0x4] sm:$0xf]
    %v87 = vld [vmem:[#allocation5 + $0x8] sm:$0xf]
    %v88 = vld [vmem:[#allocation5 + $0xc] sm:$0xf]
    %v89 = vld [vmem:[#allocation5 + $0x10] sm:$0xf]
    %v90 = vld [vmem:[#allocation5 + $0x14] sm:$0xf]
    %v91 = vld [vmem:[#allocation5 + $0x18] sm:$0xf]
    %v92 = vld [vmem:[#allocation5 + $0x1c] sm:$0xf]
    %v93 = vld [vmem:[#allocation5 + $0x20] sm:$0xf]
    %v94 = vld [vmem:[#allocation5 + $0x24] sm:$0xf]
    %v95 = vld [vmem:[#allocation5 + $0x28] sm:$0xf]
    %v96 = vld [vmem:[#allocation5 + $0x2c] sm:$0xf]
    %v97 = vld [vmem:[#allocation5 + $0x30] sm:$0xf]
    %v98 = vld [vmem:[#allocation5 + $0x34] sm:$0xf]
    %v99 = vld [vmem:[#allocation5 + $0x38] sm:$0xf]
    %v100 = vld [vmem:[#allocation5 + $0x3c] sm:$0xf]
    %v101 = vld [vmem:[%s4] sm:$0x1]
    %v103 = vlaneseq
    %v104 = vshrl.u32 %v103, 7
    %v105 = vsub.s32 0, %v104
    %v106 = vrot.slane %v101, %v105
    %v110 = vunpack.c.l.b16 %v83
    %v111 = vunpack.c.l.b16 %v84
    %v112 = vpack.c.b16 %v111, %v110
    %v130 = vunpack.c.l.b16 %v85
    %v131 = vunpack.c.l.b16 %v86
    %v132 = vunpack.c.l.b16 %v87
    %v133 = vunpack.c.l.b16 %v88
    %v134 = vunpack.c.l.b16 %v89
    %v135 = vunpack.c.l.b16 %v90
    %v136 = vunpack.c.l.b16 %v91
    %v137 = vunpack.c.l.b16 %v92
    %v138 = vunpack.c.l.b16 %v93
    %v139 = vunpack.c.l.b16 %v94
    %v140 = vunpack.c.l.b16 %v95
    %v141 = vunpack.c.l.b16 %v96
    %v142 = vunpack.c.l.b16 %v97
    %v143 = vunpack.c.l.b16 %v98
    %v144 = vunpack.c.l.b16 %v99
    %v145 = vunpack.c.l.b16 %v100
    %v146 = vpack.c.b16 %v131, %v130
    %v147 = vpack.c.b16 %v133, %v132
    %v148 = vpack.c.b16 %v135, %v134
    %v149 = vpack.c.b16 %v137, %v136
    %v150 = vpack.c.b16 %v139, %v138
    %v151 = vpack.c.b16 %v141, %v140
    %v152 = vpack.c.b16 %v143, %v142
    %v153 = vpack.c.b16 %v145, %v144
    %162 = vmatprep.subr.bf16.mxu0 0
    %163 = vmatpush1.bf16.msra.mxu0 %v146
    %164 = vmatprep.subr.bf16.mxu0 0
    %165 = vmatpush1.bf16.msra.mxu0 %v147
    %166 = vmatprep.subr.bf16.mxu0 0
    %167 = vmatpush1.bf16.msra.mxu0 %v148
    %168 = vmatprep.subr.bf16.mxu0 0
    %169 = vmatpush1.bf16.msra.mxu0 %v149
    %170 = vmatprep.subr.bf16.mxu0 0
    %171 = vmatpush1.bf16.msra.mxu0 %v150
    %172 = vmatprep.subr.bf16.mxu0 0
    %173 = vmatpush1.bf16.msra.mxu0 %v151
    %174 = vmatprep.subr.bf16.mxu0 0
    %175 = vmatpush1.bf16.msra.mxu0 %v152
    %176 = vmatprep.subr.bf16.mxu0 0
    %177 = vmatpush1.bf16.msra.mxu0 %v153
    %178 = vmatprep.subr.bf16.mxu0 0
    %179 = vmatpush1.bf16.msra.mxu0 0
    %180 = vmatprep.subr.bf16.mxu0 0
    %181 = vmatpush1.bf16.msra.mxu0 0
    %182 = vmatprep.subr.bf16.mxu0 0
    %183 = vmatpush1.bf16.msra.mxu0 0
    %184 = vmatprep.subr.bf16.mxu0 0
    %185 = vmatpush1.bf16.msra.mxu0 0
    %186 = vmatprep.subr.bf16.mxu0 0
    %187 = vmatpush1.bf16.msra.mxu0 0
    %188 = vmatprep.subr.bf16.mxu0 0
    %189 = vmatpush1.bf16.msra.mxu0 0
    %190 = vmatprep.subr.bf16.mxu0 0
    %191 = vmatpush1.bf16.msra.mxu0 0
    %192 = vmatprep.subr.bf16.mxu0 0
    %193 = vmatpush1.bf16.msra.mxu0 0
    %194 = vmatprep.mubr.bf16.mxu0 0
    %195 = vmatmul.mubr.bf16.gmra.mrb[0].mxu0 %v112
    %v196 = vpop.f32.mrb[0].mxu0
    %v197 = vadd.f32 %v106, %v196
    %v198 = vpop.f32.mrb[0].mxu0
    %v199 = vpop.f32.mrb[0].mxu0
    %v200 = vadd.f32 %v106, %v199
    %v201 = vpop.f32.mrb[0].mxu0
    %202 = vdwg.mxu0
    %v203 = vmax.f32 %v197, 0.0
    %v204 = vmax.f32 %v200, 0.0
    %v205 = vpack.c.bf16 %v204, %v203
    %v206 = vld [vmem:[#allocation7] sm:$0xf]
    %v207 = vld [vmem:[#allocation7 + $0x4] sm:$0xf]
    %v208 = vld [vmem:[#allocation7 + $0x8] sm:$0xf]
    %v209 = vld [vmem:[#allocation7 + $0xc] sm:$0xf]
    %v210 = vld [vmem:[#allocation7 + $0x10] sm:$0xf]
    %v211 = vld [vmem:[#allocation7 + $0x14] sm:$0xf]
    %v212 = vld [vmem:[#allocation7 + $0x18] sm:$0xf]
    %v213 = vld [vmem:[#allocation7 + $0x1c] sm:$0xf]
    %v214 = vld [vmem:[#allocation7 + $0x20] sm:$0xf]
    %v215 = vld [vmem:[#allocation7 + $0x24] sm:$0xf]
    %v216 = vld [vmem:[#allocation7 + $0x28] sm:$0xf]
    %v217 = vld [vmem:[#allocation7 + $0x2c] sm:$0xf]
    %v218 = vld [vmem:[#allocation7 + $0x30] sm:$0xf]
    %v219 = vld [vmem:[#allocation7 + $0x34] sm:$0xf]
    %v220 = vld [vmem:[#allocation7 + $0x38] sm:$0xf]
    %v221 = vld [vmem:[#allocation7 + $0x3c] sm:$0xf]
    %v222 = vld [vmem:[%s5] sm:$0x1]
    %v224 = vlaneseq
    %v225 = vshrl.u32 %v224, 7
    %v226 = vsub.s32 0, %v225
    %v227 = vrot.slane %v222, %v226
    %v245 = vunpack.c.l.b16 %v206
    %v246 = vunpack.c.l.b16 %v207
    %v247 = vunpack.c.l.b16 %v208
    %v248 = vunpack.c.l.b16 %v209
    %v249 = vunpack.c.l.b16 %v210
    %v250 = vunpack.c.l.b16 %v211
    %v251 = vunpack.c.l.b16 %v212
    %v252 = vunpack.c.l.b16 %v213
    %v253 = vunpack.c.l.b16 %v214
    %v254 = vunpack.c.l.b16 %v215
    %v255 = vunpack.c.l.b16 %v216
    %v256 = vunpack.c.l.b16 %v217
    %v257 = vunpack.c.l.b16 %v218
    %v258 = vunpack.c.l.b16 %v219
    %v259 = vunpack.c.l.b16 %v220
    %v260 = vunpack.c.l.b16 %v221
    %v261 = vpack.c.b16 %v246, %v245
    %v262 = vpack.c.b16 %v248, %v247
    %v263 = vpack.c.b16 %v250, %v249
    %v264 = vpack.c.b16 %v252, %v251
    %v265 = vpack.c.b16 %v254, %v253
    %v266 = vpack.c.b16 %v256, %v255
    %v267 = vpack.c.b16 %v258, %v257
    %v268 = vpack.c.b16 %v260, %v259
    %277 = vmatprep.subr.bf16.mxu0 0
    %278 = vmatpush1.bf16.msra.mxu0 %v261
    %279 = vmatprep.subr.bf16.mxu0 0
    %280 = vmatpush1.bf16.msra.mxu0 %v262
    %281 = vmatprep.subr.bf16.mxu0 0
    %282 = vmatpush1.bf16.msra.mxu0 %v263
    %283 = vmatprep.subr.bf16.mxu0 0
    %284 = vmatpush1.bf16.msra.mxu0 %v264
    %285 = vmatprep.subr.bf16.mxu0 0
    %286 = vmatpush1.bf16.msra.mxu0 %v265
    %287 = vmatprep.subr.bf16.mxu0 0
    %288 = vmatpush1.bf16.msra.mxu0 %v266
    %289 = vmatprep.subr.bf16.mxu0 0
    %290 = vmatpush1.bf16.msra.mxu0 %v267
    %291 = vmatprep.subr.bf16.mxu0 0
    %292 = vmatpush1.bf16.msra.mxu0 %v268
    %293 = vmatprep.subr.bf16.mxu0 0
    %294 = vmatpush1.bf16.msra.mxu0 0
    %295 = vmatprep.subr.bf16.mxu0 0
    %296 = vmatpush1.bf16.msra.mxu0 0
    %297 = vmatprep.subr.bf16.mxu0 0
    %298 = vmatpush1.bf16.msra.mxu0 0
    %299 = vmatprep.subr.bf16.mxu0 0
    %300 = vmatpush1.bf16.msra.mxu0 0
    %301 = vmatprep.subr.bf16.mxu0 0
    %302 = vmatpush1.bf16.msra.mxu0 0
    %303 = vmatprep.subr.bf16.mxu0 0
    %304 = vmatpush1.bf16.msra.mxu0 0
    %305 = vmatprep.subr.bf16.mxu0 0
    %306 = vmatpush1.bf16.msra.mxu0 0
    %307 = vmatprep.subr.bf16.mxu0 0
    %308 = vmatpush1.bf16.msra.mxu0 0
    %309 = vmatprep.mubr.bf16.mxu0 0
    %310 = vmatmul.mubr.bf16.gmra.mrb[0].mxu0 %v205
    %v311 = vpop.f32.mrb[0].mxu0
    %v312 = vadd.f32 %v227, %v311
    %v313 = vpop.f32.mrb[0].mxu0
    %v314 = vpop.f32.mrb[0].mxu0
    %v315 = vadd.f32 %v227, %v314
    %v316 = vpop.f32.mrb[0].mxu0
    %317 = vdwg.mxu0
    %v318 = vmax.f32 %v312, 0.0
    %v319 = vmax.f32 %v315, 0.0
    %v320 = vpack.c.bf16 %v319, %v318
    %v321 = vld [vmem:[#allocation8] sm:$0xf]
    %v322 = vld [vmem:[#allocation8 + $0x4] sm:$0xf]
    %v323 = vld [vmem:[#allocation8 + $0x8] sm:$0xf]
    %v324 = vld [vmem:[#allocation8 + $0xc] sm:$0xf]
    %v325 = vld [vmem:[#allocation8 + $0x10] sm:$0xf]
    %v326 = vld [vmem:[#allocation8 + $0x14] sm:$0xf]
    %v327 = vld [vmem:[#allocation8 + $0x18] sm:$0xf]
    %v328 = vld [vmem:[#allocation8 + $0x1c] sm:$0xf]
    %v329 = vld [vmem:[#allocation8 + $0x20] sm:$0xf]
    %v330 = vld [vmem:[#allocation8 + $0x24] sm:$0xf]
    %v331 = vld [vmem:[#allocation8 + $0x28] sm:$0xf]
    %v332 = vld [vmem:[#allocation8 + $0x2c] sm:$0xf]
    %v333 = vld [vmem:[#allocation8 + $0x30] sm:$0xf]
    %v334 = vld [vmem:[#allocation8 + $0x34] sm:$0xf]
    %v335 = vld [vmem:[#allocation8 + $0x38] sm:$0xf]
    %v336 = vld [vmem:[#allocation8 + $0x3c] sm:$0xf]
    %v337 = vld [vmem:[%s6] sm:$0x1]
    %v339 = vlaneseq
    %v340 = vshrl.u32 %v339, 7
    %v341 = vsub.s32 0, %v340
    %v342 = vrot.slane %v337, %v341
    %v360 = vunpack.c.l.b16 %v321
    %v361 = vunpack.c.l.b16 %v322
    %v362 = vunpack.c.l.b16 %v323
    %v363 = vunpack.c.l.b16 %v324
    %v364 = vunpack.c.l.b16 %v325
    %v365 = vunpack.c.l.b16 %v326
    %v366 = vunpack.c.l.b16 %v327
    %v367 = vunpack.c.l.b16 %v328
    %v368 = vunpack.c.l.b16 %v329
    %v369 = vunpack.c.l.b16 %v330
    %v370 = vunpack.c.l.b16 %v331
    %v371 = vunpack.c.l.b16 %v332
    %v372 = vunpack.c.l.b16 %v333
    %v373 = vunpack.c.l.b16 %v334
    %v374 = vunpack.c.l.b16 %v335
    %v375 = vunpack.c.l.b16 %v336
    %v376 = vpack.c.b16 %v361, %v360
    %v377 = vpack.c.b16 %v363, %v362
    %v378 = vpack.c.b16 %v365, %v364
    %v379 = vpack.c.b16 %v367, %v366
    %v380 = vpack.c.b16 %v369, %v368
    %v381 = vpack.c.b16 %v371, %v370
    %v382 = vpack.c.b16 %v373, %v372
    %v383 = vpack.c.b16 %v375, %v374
    %392 = vmatprep.subr.bf16.mxu0 0
    %393 = vmatpush1.bf16.msra.mxu0 %v376
    %394 = vmatprep.subr.bf16.mxu0 0
    %395 = vmatpush1.bf16.msra.mxu0 %v377
    %396 = vmatprep.subr.bf16.mxu0 0
    %397 = vmatpush1.bf16.msra.mxu0 %v378
    %398 = vmatprep.subr.bf16.mxu0 0
    %399 = vmatpush1.bf16.msra.mxu0 %v379
    %400 = vmatprep.subr.bf16.mxu0 0
    %401 = vmatpush1.bf16.msra.mxu0 %v380
    %402 = vmatprep.subr.bf16.mxu0 0
    %403 = vmatpush1.bf16.msra.mxu0 %v381
    %404 = vmatprep.subr.bf16.mxu0 0
    %405 = vmatpush1.bf16.msra.mxu0 %v382
    %406 = vmatprep.subr.bf16.mxu0 0
    %407 = vmatpush1.bf16.msra.mxu0 %v383
    %408 = vmatprep.subr.bf16.mxu0 0
    %409 = vmatpush1.bf16.msra.mxu0 0
    %410 = vmatprep.subr.bf16.mxu0 0
    %411 = vmatpush1.bf16.msra.mxu0 0
    %412 = vmatprep.subr.bf16.mxu0 0
    %413 = vmatpush1.bf16.msra.mxu0 0
    %414 = vmatprep.subr.bf16.mxu0 0
    %415 = vmatpush1.bf16.msra.mxu0 0
    %416 = vmatprep.subr.bf16.mxu0 0
    %417 = vmatpush1.bf16.msra.mxu0 0
    %418 = vmatprep.subr.bf16.mxu0 0
    %419 = vmatpush1.bf16.msra.mxu0 0
    %420 = vmatprep.subr.bf16.mxu0 0
    %421 = vmatpush1.bf16.msra.mxu0 0
    %422 = vmatprep.subr.bf16.mxu0 0
    %423 = vmatpush1.bf16.msra.mxu0 0
    %424 = vmatprep.mubr.bf16.mxu0 0
    %425 = vmatmul.mubr.bf16.gmra.mrb[0].mxu0 %v320
    %v426 = vpop.f32.mrb[0].mxu0
    %v427 = vadd.f32 %v342, %v426
    %v428 = vpop.f32.mrb[0].mxu0
    %v429 = vpop.f32.mrb[0].mxu0
    %v430 = vadd.f32 %v342, %v429
    %v431 = vpop.f32.mrb[0].mxu0
    %432 = vdwg.mxu0
    %433 = vst [vmem:[#allocation10] sm:$0xff] %v427
    %434 = vst [vmem:[#allocation10 + $0x8] sm:$0xff] %v430
    // Predicated region
    $region46: #{tpu_custom_call.1} parent=1 // pred_check
      _
    $region47: #{tpu_custom_call.1} parent=1 // pred_check_branch
      %436 = sbr.rel (0) target = $region49
    $region48: #{tpu_custom_call.1} parent=1 // pred_region
      %s438 = ssub.s32 256, 256
      %439 = vsyncadd [#allocation4], %s438
      %s440 = sshll.u32 [#allocation10], 4
      %s441 = int_to_ptr.vmem [resolvable:$true] %s440
      %446 = dma.vmem_to_hbm [thread:$0]  %s441, 256, %s7, [#allocation4], 128, 128, 8
    $region49: #{tpu_custom_call.1} parent=1 // pred_fallthru
      _
    // Predicated region
    $region50: #{tpu_custom_call.1} parent=1 // pred_check
      _
    $region51: #{tpu_custom_call.1} parent=1 // pred_check_branch
      %448 = sbr.rel (0) target = $region53
    $region52: #{tpu_custom_call.1} parent=1 // pred_region
      %449 = dma.done [#allocation4], 256
    $region53: #{tpu_custom_call.1} parent=1 // pred_fallthru
      _
    %450 = vsyncpa [#allocation3], 1
    %451 = vsyncpa [#allocation6], 1
    %452 = vsyncpa [#allocation9], 1
    %453 = vsyncpa [#allocation4], 1

// kernel: tpu_custom_call.1
$region0: #{tpu_custom_call.1}
  #allocation0 [shape = 'u32[]', space=smem, size = 0x4, offset = 0x4, fixed_abs, tag = 'smem constant byte address 0x4 - core index']
  #allocation1 [shape = 'u32[144,128]{1,0:T(1,128)}', space=vmem, size = 0x12000, scoped, tag = 'internal scratch']
  %s0 = inlined_call_operand.hbm [shape: bf16[16,128], index: 0, kind: input, shape index: {}]
  %s1 = inlined_call_operand.hbm [shape: bf16[128,128], index: 1, kind: input, shape index: {}]
  %s2 = inlined_call_operand.hbm [shape: bf16[128,128], index: 2, kind: input, shape index: {}]
  %s3 = inlined_call_operand.hbm [shape: bf16[128,128], index: 3, kind: input, shape index: {}]
  %s4 = inlined_call_operand.vmem [shape: f32[1,128], index: 4, kind: input, shape index: {}]
  %s5 = inlined_call_operand.vmem [shape: f32[1,128], index: 5, kind: input, shape index: {}]
  %s6 = inlined_call_operand.vmem [shape: f32[1,128], index: 6, kind: input, shape index: {}]
  %s7 = inlined_call_operand.hbm [shape: f32[16,128], index: 7, kind: output, shape index: {}]
  %s8 = sld [smem:[#allocation0]]
  $region54: #{tpu_custom_call.1} parent=0
    _
  %s10 = ssub.s32 1, %s8
  %s11 = scalar_select 0, %s10, %s8
  $region1: #{tpu_custom_call.1} parent=0
    #allocation2 [shape = 'u8[4096]{0}', space=vmem, size = 0x1000, scoped, tag = 'input window, operand 0, single buffered']
    #allocation3 [shape = 's32[1]{0}', space=sflag, size = 0x4, scoped, tag = 'scoped memory for tpu_custom_call.1']
    #allocation4 [shape = 's32[1]{0}', space=sflag, size = 0x4, scoped, tag = 'scoped memory for tpu_custom_call.1']
    #allocation5 [shape = 'u8[32768]{0}', space=vmem, size = 0x8000, scoped, tag = 'input window, operand 1, single buffered']
    #allocation6 [shape = 's32[1]{0}', space=sflag, size = 0x4, scoped, tag = 'scoped memory for tpu_custom_call.1']
    #allocation7 [shape = 'u8[32768]{0}', space=vmem, size = 0x8000, scoped, tag = 'input window, operand 2, single buffered']
    #allocation8 [shape = 'u8[32768]{0}', space=vmem, size = 0x8000, scoped, tag = 'input window, operand 3, single buffered']
    #allocation9 [shape = 's32[1]{0}', space=sflag, size = 0x4, scoped, tag = 'scoped memory for tpu_custom_call.1']
    #allocation10 [shape = 'u8[8192]{0}', space=vmem, size = 0x2000, scoped, tag = 'output window, operand 0, single buffered']
    %12 = vsyncpa [#allocation3], 0
    %13 = vsyncpa [#allocation6], 0
    %14 = vsyncpa [#allocation9], 0
    %15 = vsyncpa [#allocation4], 0
    // Predicated region
    $region2: #{tpu_custom_call.1} parent=1 // pred_check
      _
    $region3: #{tpu_custom_call.1} parent=1 // pred_check_branch
      %17 = sbr.rel (0) target = $region5
    $region4: #{tpu_custom_call.1} parent=1 // pred_region
      %s19 = ssub.s32 128, 128
      %20 = vsyncadd [#allocation3], %s19
      %s21 = sshll.u32 [#allocation2], 4
      %s22 = int_to_ptr.vmem [resolvable:$true] %s21
      %27 = dma.hbm_to_vmem [thread:$0]  %s0, 128, %s22, [#allocation3], 64, 64, 4
    $region5: #{tpu_custom_call.1} parent=1 // pred_fallthru
      _
    // Predicated region
    $region6: #{tpu_custom_call.1} parent=1 // pred_check
      _
    $region7: #{tpu_custom_call.1} parent=1 // pred_check_branch
      %29 = sbr.rel (0) target = $region9
    $region8: #{tpu_custom_call.1} parent=1 // pred_region
      %s31 = ssub.s32 1024, 1024
      %32 = vsyncadd [#allocation6], %s31
      %s33 = sshll.u32 [#allocation5], 4
      %s34 = int_to_ptr.vmem [resolvable:$true] %s33
      %39 = dma.hbm_to_vmem [thread:$0]  %s1, 1024, %s34, [#allocation6], 64, 64, 4
    $region9: #{tpu_custom_call.1} parent=1 // pred_fallthru
      _
    // Predicated region
    $region10: #{tpu_custom_call.1} parent=1 // pred_check
      _
    $region11: #{tpu_custom_call.1} parent=1 // pred_check_branch
      %41 = sbr.rel (0) target = $region13
    $region12: #{tpu_custom_call.1} parent=1 // pred_region
      %s43 = ssub.s32 1024, 1024
      %44 = vsyncadd [#allocation6], %s43
      %s45 = sshll.u32 [#allocation7], 4
      %s46 = int_to_ptr.vmem [resolvable:$true] %s45
      %51 = dma.hbm_to_vmem [thread:$0]  %s2, 1024, %s46, [#allocation6], 64, 64, 4
    $region13: #{tpu_custom_call.1} parent=1 // pred_fallthru
      _
    // Predicated region
    $region14: #{tpu_custom_call.1} parent=1 // pred_check
      _
    $region15: #{tpu_custom_call.1} parent=1 // pred_check_branch
      %53 = sbr.rel (0) target = $region17
    $region16: #{tpu_custom_call.1} parent=1 // pred_region
      %s55 = ssub.s32 1024, 1024
      %56 = vsyncadd [#allocation9], %s55
      %s57 = sshll.u32 [#allocation8], 4
      %s58 = int_to_ptr.vmem [resolvable:$true] %s57
      %63 = dma.hbm_to_vmem [thread:$0]  %s3, 1024, %s58, [#allocation9], 64, 64, 4
    $region17: #{tpu_custom_call.1} parent=1 // pred_fallthru
      _
    // Predicated region
    $region18: #{tpu_custom_call.1} parent=1 // pred_check
      _
    $region19: #{tpu_custom_call.1} parent=1 // pred_check_branch
      %65 = sbr.rel (0) target = $region21
    $region20: #{tpu_custom_call.1} parent=1 // pred_region
      _
    $region21: #{tpu_custom_call.1} parent=1 // pred_fallthru
      _
    // Predicated region
    $region22: #{tpu_custom_call.1} parent=1 // pred_check
      _
    $region23: #{tpu_custom_call.1} parent=1 // pred_check_branch
      %67 = sbr.rel (0) target = $region25
    $region24: #{tpu_custom_call.1} parent=1 // pred_region
      _
    $region25: #{tpu_custom_call.1} parent=1 // pred_fallthru
      _
    // Predicated region
    $region26: #{tpu_custom_call.1} parent=1 // pred_check
      _
    $region27: #{tpu_custom_call.1} parent=1 // pred_check_branch
      %69 = sbr.rel (0) target = $region29
    $region28: #{tpu_custom_call.1} parent=1 // pred_region
      _
    $region29: #{tpu_custom_call.1} parent=1 // pred_fallthru
      _
    // Predicated region
    $region30: #{tpu_custom_call.1} parent=1 // pred_check
      _
    $region31: #{tpu_custom_call.1} parent=1 // pred_check_branch
      %71 = sbr.rel (0) target = $region33
    $region32: #{tpu_custom_call.1} parent=1 // pred_region
      %72 = dma.done [#allocation3], 128
    $region33: #{tpu_custom_call.1} parent=1 // pred_fallthru
      _
    // Predicated region
    $region34: #{tpu_custom_call.1} parent=1 // pred_check
      _
    $region35: #{tpu_custom_call.1} parent=1 // pred_check_branch
      %74 = sbr.rel (0) target = $region37
    $region36: #{tpu_custom_call.1} parent=1 // pred_region
      %75 = dma.done [#allocation6], 1024
    $region37: #{tpu_custom_call.1} parent=1 // pred_fallthru
      _
    // Predicated region
    $region38: #{tpu_custom_call.1} parent=1 // pred_check
      _
    $region39: #{tpu_custom_call.1} parent=1 // pred_check_branch
      %77 = sbr.rel (0) target = $region41
    $region40: #{tpu_custom_call.1} parent=1 // pred_region
      %78 = dma.done [#allocation6], 1024
    $region41: #{tpu_custom_call.1} parent=1 // pred_fallthru
      _
    // Predicated region
    $region42: #{tpu_custom_call.1} parent=1 // pred_check
      _
    $region43: #{tpu_custom_call.1} parent=1 // pred_check_branch
      %80 = sbr.rel (0) target = $region45
    $region44: #{tpu_custom_call.1} parent=1 // pred_region
      %81 = dma.done [#allocation9], 1024
    $region45: #{tpu_custom_call.1} parent=1 // pred_fallthru
      _
    %v83 = vld [vmem:[#allocation2] sm:$0xf]
    %v84 = vld [vmem:[#allocation2 + $0x4] sm:$0xf]
    %v85 = vld [vmem:[#allocation5] sm:$0xf]
    %v86 = vld [vmem:[#allocation5 + $0x4] sm:$0xf]
    %v87 = vld [vmem:[#allocation5 + $0x8] sm:$0xf]
    %v88 = vld [vmem:[#allocation5 + $0xc] sm:$0xf]
    %v89 = vld [vmem:[#allocation5 + $0x10] sm:$0xf]
    %v90 = vld [vmem:[#allocation5 + $0x14] sm:$0xf]
    %v91 = vld [vmem:[#allocation5 + $0x18] sm:$0xf]
    %v92 = vld [vmem:[#allocation5 + $0x1c] sm:$0xf]
    %v93 = vld [vmem:[#allocation5 + $0x20] sm:$0xf]
    %v94 = vld [vmem:[#allocation5 + $0x24] sm:$0xf]
    %v95 = vld [vmem:[#allocation5 + $0x28] sm:$0xf]
    %v96 = vld [vmem:[#allocation5 + $0x2c] sm:$0xf]
    %v97 = vld [vmem:[#allocation5 + $0x30] sm:$0xf]
    %v98 = vld [vmem:[#allocation5 + $0x34] sm:$0xf]
    %v99 = vld [vmem:[#allocation5 + $0x38] sm:$0xf]
    %v100 = vld [vmem:[#allocation5 + $0x3c] sm:$0xf]
    %v101 = vld [vmem:[%s4] sm:$0x1]
    %v103 = vlaneseq
    %v104 = vshrl.u32 %v103, 7
    %v105 = vsub.s32 0, %v104
    %v106 = vrot.slane %v101, %v105
    %v110 = vunpack.c.l.b16 %v83
    %v111 = vunpack.c.l.b16 %v84
    %v112 = vpack.c.b16 %v111, %v110
    %v130 = vunpack.c.l.b16 %v85
    %v131 = vunpack.c.l.b16 %v86
    %v132 = vunpack.c.l.b16 %v87
    %v133 = vunpack.c.l.b16 %v88
    %v134 = vunpack.c.l.b16 %v89
    %v135 = vunpack.c.l.b16 %v90
    %v136 = vunpack.c.l.b16 %v91
    %v137 = vunpack.c.l.b16 %v92
    %v138 = vunpack.c.l.b16 %v93
    %v139 = vunpack.c.l.b16 %v94
    %v140 = vunpack.c.l.b16 %v95
    %v141 = vunpack.c.l.b16 %v96
    %v142 = vunpack.c.l.b16 %v97
    %v143 = vunpack.c.l.b16 %v98
    %v144 = vunpack.c.l.b16 %v99
    %v145 = vunpack.c.l.b16 %v100
    %v146 = vpack.c.b16 %v131, %v130
    %v147 = vpack.c.b16 %v133, %v132
    %v148 = vpack.c.b16 %v135, %v134
    %v149 = vpack.c.b16 %v137, %v136
    %v150 = vpack.c.b16 %v139, %v138
    %v151 = vpack.c.b16 %v141, %v140
    %v152 = vpack.c.b16 %v143, %v142
    %v153 = vpack.c.b16 %v145, %v144
    %162 = vmatprep.subr.bf16.mxu0 0
    %163 = vmatpush1.bf16.msra.mxu0 %v146
    %164 = vmatprep.subr.bf16.mxu0 0
    %165 = vmatpush1.bf16.msra.mxu0 %v147
    %166 = vmatprep.subr.bf16.mxu0 0
    %167 = vmatpush1.bf16.msra.mxu0 %v148
    %168 = vmatprep.subr.bf16.mxu0 0
    %169 = vmatpush1.bf16.msra.mxu0 %v149
    %170 = vmatprep.subr.bf16.mxu0 0
    %171 = vmatpush1.bf16.msra.mxu0 %v150
    %172 = vmatprep.subr.bf16.mxu0 0
    %173 = vmatpush1.bf16.msra.mxu0 %v151
    %174 = vmatprep.subr.bf16.mxu0 0
    %175 = vmatpush1.bf16.msra.mxu0 %v152
    %176 = vmatprep.subr.bf16.mxu0 0
    %177 = vmatpush1.bf16.msra.mxu0 %v153
    %178 = vmatprep.subr.bf16.mxu0 0
    %179 = vmatpush1.bf16.msra.mxu0 0
    %180 = vmatprep.subr.bf16.mxu0 0
    %181 = vmatpush1.bf16.msra.mxu0 0
    %182 = vmatprep.subr.bf16.mxu0 0
    %183 = vmatpush1.bf16.msra.mxu0 0
    %184 = vmatprep.subr.bf16.mxu0 0
    %185 = vmatpush1.bf16.msra.mxu0 0
    %186 = vmatprep.subr.bf16.mxu0 0
    %187 = vmatpush1.bf16.msra.mxu0 0
    %188 = vmatprep.subr.bf16.mxu0 0
    %189 = vmatpush1.bf16.msra.mxu0 0
    %190 = vmatprep.subr.bf16.mxu0 0
    %191 = vmatpush1.bf16.msra.mxu0 0
    %192 = vmatprep.subr.bf16.mxu0 0
    %193 = vmatpush1.bf16.msra.mxu0 0
    %194 = vmatprep.mubr.bf16.mxu0 0
    %195 = vmatmul.mubr.bf16.gmra.mrb[0].mxu0 %v112
    %v196 = vpop.f32.mrb[0].mxu0
    %v197 = vadd.f32 %v106, %v196
    %v198 = vpop.f32.mrb[0].mxu0
    %v199 = vpop.f32.mrb[0].mxu0
    %v200 = vadd.f32 %v106, %v199
    %v201 = vpop.f32.mrb[0].mxu0
    %202 = vdwg.mxu0
    %v203 = vmax.f32 %v197, 0.0
    %v204 = vmax.f32 %v200, 0.0
    %v205 = vpack.c.bf16 %v204, %v203
    %v206 = vld [vmem:[#allocation7] sm:$0xf]
    %v207 = vld [vmem:[#allocation7 + $0x4] sm:$0xf]
    %v208 = vld [vmem:[#allocation7 + $0x8] sm:$0xf]
    %v209 = vld [vmem:[#allocation7 + $0xc] sm:$0xf]
    %v210 = vld [vmem:[#allocation7 + $0x10] sm:$0xf]
    %v211 = vld [vmem:[#allocation7 + $0x14] sm:$0xf]
    %v212 = vld [vmem:[#allocation7 + $0x18] sm:$0xf]
    %v213 = vld [vmem:[#allocation7 + $0x1c] sm:$0xf]
    %v214 = vld [vmem:[#allocation7 + $0x20] sm:$0xf]
    %v215 = vld [vmem:[#allocation7 + $0x24] sm:$0xf]
    %v216 = vld [vmem:[#allocation7 + $0x28] sm:$0xf]
    %v217 = vld [vmem:[#allocation7 + $0x2c] sm:$0xf]
    %v218 = vld [vmem:[#allocation7 + $0x30] sm:$0xf]
    %v219 = vld [vmem:[#allocation7 + $0x34] sm:$0xf]
    %v220 = vld [vmem:[#allocation7 + $0x38] sm:$0xf]
    %v221 = vld [vmem:[#allocation7 + $0x3c] sm:$0xf]
    %v222 = vld [vmem:[%s5] sm:$0x1]
    %v224 = vlaneseq
    %v225 = vshrl.u32 %v224, 7
    %v226 = vsub.s32 0, %v225
    %v227 = vrot.slane %v222, %v226
    %v245 = vunpack.c.l.b16 %v206
    %v246 = vunpack.c.l.b16 %v207
    %v247 = vunpack.c.l.b16 %v208
    %v248 = vunpack.c.l.b16 %v209
    %v249 = vunpack.c.l.b16 %v210
    %v250 = vunpack.c.l.b16 %v211
    %v251 = vunpack.c.l.b16 %v212
    %v252 = vunpack.c.l.b16 %v213
    %v253 = vunpack.c.l.b16 %v214
    %v254 = vunpack.c.l.b16 %v215
    %v255 = vunpack.c.l.b16 %v216
    %v256 = vunpack.c.l.b16 %v217
    %v257 = vunpack.c.l.b16 %v218
    %v258 = vunpack.c.l.b16 %v219
    %v259 = vunpack.c.l.b16 %v220
    %v260 = vunpack.c.l.b16 %v221
    %v261 = vpack.c.b16 %v246, %v245
    %v262 = vpack.c.b16 %v248, %v247
    %v263 = vpack.c.b16 %v250, %v249
    %v264 = vpack.c.b16 %v252, %v251
    %v265 = vpack.c.b16 %v254, %v253
    %v266 = vpack.c.b16 %v256, %v255
    %v267 = vpack.c.b16 %v258, %v257
    %v268 = vpack.c.b16 %v260, %v259
    %277 = vmatprep.subr.bf16.mxu0 0
    %278 = vmatpush1.bf16.msra.mxu0 %v261
    %279 = vmatprep.subr.bf16.mxu0 0
    %280 = vmatpush1.bf16.msra.mxu0 %v262
    %281 = vmatprep.subr.bf16.mxu0 0
    %282 = vmatpush1.bf16.msra.mxu0 %v263
    %283 = vmatprep.subr.bf16.mxu0 0
    %284 = vmatpush1.bf16.msra.mxu0 %v264
    %285 = vmatprep.subr.bf16.mxu0 0
    %286 = vmatpush1.bf16.msra.mxu0 %v265
    %287 = vmatprep.subr.bf16.mxu0 0
    %288 = vmatpush1.bf16.msra.mxu0 %v266
    %289 = vmatprep.subr.bf16.mxu0 0
    %290 = vmatpush1.bf16.msra.mxu0 %v267
    %291 = vmatprep.subr.bf16.mxu0 0
    %292 = vmatpush1.bf16.msra.mxu0 %v268
    %293 = vmatprep.subr.bf16.mxu0 0
    %294 = vmatpush1.bf16.msra.mxu0 0
    %295 = vmatprep.subr.bf16.mxu0 0
    %296 = vmatpush1.bf16.msra.mxu0 0
    %297 = vmatprep.subr.bf16.mxu0 0
    %298 = vmatpush1.bf16.msra.mxu0 0
    %299 = vmatprep.subr.bf16.mxu0 0
    %300 = vmatpush1.bf16.msra.mxu0 0
    %301 = vmatprep.subr.bf16.mxu0 0
    %302 = vmatpush1.bf16.msra.mxu0 0
    %303 = vmatprep.subr.bf16.mxu0 0
    %304 = vmatpush1.bf16.msra.mxu0 0
    %305 = vmatprep.subr.bf16.mxu0 0
    %306 = vmatpush1.bf16.msra.mxu0 0
    %307 = vmatprep.subr.bf16.mxu0 0
    %308 = vmatpush1.bf16.msra.mxu0 0
    %309 = vmatprep.mubr.bf16.mxu0 0
    %310 = vmatmul.mubr.bf16.gmra.mrb[0].mxu0 %v205
    %v311 = vpop.f32.mrb[0].mxu0
    %v312 = vadd.f32 %v227, %v311
    %v313 = vpop.f32.mrb[0].mxu0
    %v314 = vpop.f32.mrb[0].mxu0
    %v315 = vadd.f32 %v227, %v314
    %v316 = vpop.f32.mrb[0].mxu0
    %317 = vdwg.mxu0
    %v318 = vmax.f32 %v312, 0.0
    %v319 = vmax.f32 %v315, 0.0
    %v320 = vpack.c.bf16 %v319, %v318
    %v321 = vld [vmem:[#allocation8] sm:$0xf]
    %v322 = vld [vmem:[#allocation8 + $0x4] sm:$0xf]
    %v323 = vld [vmem:[#allocation8 + $0x8] sm:$0xf]
    %v324 = vld [vmem:[#allocation8 + $0xc] sm:$0xf]
    %v325 = vld [vmem:[#allocation8 + $0x10] sm:$0xf]
    %v326 = vld [vmem:[#allocation8 + $0x14] sm:$0xf]
    %v327 = vld [vmem:[#allocation8 + $0x18] sm:$0xf]
    %v328 = vld [vmem:[#allocation8 + $0x1c] sm:$0xf]
    %v329 = vld [vmem:[#allocation8 + $0x20] sm:$0xf]
    %v330 = vld [vmem:[#allocation8 + $0x24] sm:$0xf]
    %v331 = vld [vmem:[#allocation8 + $0x28] sm:$0xf]
    %v332 = vld [vmem:[#allocation8 + $0x2c] sm:$0xf]
    %v333 = vld [vmem:[#allocation8 + $0x30] sm:$0xf]
    %v334 = vld [vmem:[#allocation8 + $0x34] sm:$0xf]
    %v335 = vld [vmem:[#allocation8 + $0x38] sm:$0xf]
    %v336 = vld [vmem:[#allocation8 + $0x3c] sm:$0xf]
    %v337 = vld [vmem:[%s6] sm:$0x1]
    %v339 = vlaneseq
    %v340 = vshrl.u32 %v339, 7
    %v341 = vsub.s32 0, %v340
    %v342 = vrot.slane %v337, %v341
    %v360 = vunpack.c.l.b16 %v321
    %v361 = vunpack.c.l.b16 %v322
    %v362 = vunpack.c.l.b16 %v323
    %v363 = vunpack.c.l.b16 %v324
    %v364 = vunpack.c.l.b16 %v325
    %v365 = vunpack.c.l.b16 %v326
    %v366 = vunpack.c.l.b16 %v327
    %v367 = vunpack.c.l.b16 %v328
    %v368 = vunpack.c.l.b16 %v329
    %v369 = vunpack.c.l.b16 %v330
    %v370 = vunpack.c.l.b16 %v331
    %v371 = vunpack.c.l.b16 %v332
    %v372 = vunpack.c.l.b16 %v333
    %v373 = vunpack.c.l.b16 %v334
    %v374 = vunpack.c.l.b16 %v335
    %v375 = vunpack.c.l.b16 %v336
    %v376 = vpack.c.b16 %v361, %v360
    %v377 = vpack.c.b16 %v363, %v362
    %v378 = vpack.c.b16 %v365, %v364
    %v379 = vpack.c.b16 %v367, %v366
    %v380 = vpack.c.b16 %v369, %v368
    %v381 = vpack.c.b16 %v371, %v370
    %v382 = vpack.c.b16 %v373, %v372
    %v383 = vpack.c.b16 %v375, %v374
    %392 = vmatprep.subr.bf16.mxu0 0
    %393 = vmatpush1.bf16.msra.mxu0 %v376
    %394 = vmatprep.subr.bf16.mxu0 0
    %395 = vmatpush1.bf16.msra.mxu0 %v377
    %396 = vmatprep.subr.bf16.mxu0 0
    %397 = vmatpush1.bf16.msra.mxu0 %v378
    %398 = vmatprep.subr.bf16.mxu0 0
    %399 = vmatpush1.bf16.msra.mxu0 %v379
    %400 = vmatprep.subr.bf16.mxu0 0
    %401 = vmatpush1.bf16.msra.mxu0 %v380
    %402 = vmatprep.subr.bf16.mxu0 0
    %403 = vmatpush1.bf16.msra.mxu0 %v381
    %404 = vmatprep.subr.bf16.mxu0 0
    %405 = vmatpush1.bf16.msra.mxu0 %v382
    %406 = vmatprep.subr.bf16.mxu0 0
    %407 = vmatpush1.bf16.msra.mxu0 %v383
    %408 = vmatprep.subr.bf16.mxu0 0
    %409 = vmatpush1.bf16.msra.mxu0 0
    %410 = vmatprep.subr.bf16.mxu0 0
    %411 = vmatpush1.bf16.msra.mxu0 0
    %412 = vmatprep.subr.bf16.mxu0 0
    %413 = vmatpush1.bf16.msra.mxu0 0
    %414 = vmatprep.subr.bf16.mxu0 0
    %415 = vmatpush1.bf16.msra.mxu0 0
    %416 = vmatprep.subr.bf16.mxu0 0
    %417 = vmatpush1.bf16.msra.mxu0 0
    %418 = vmatprep.subr.bf16.mxu0 0
    %419 = vmatpush1.bf16.msra.mxu0 0
    %420 = vmatprep.subr.bf16.mxu0 0
    %421 = vmatpush1.bf16.msra.mxu0 0
    %422 = vmatprep.subr.bf16.mxu0 0
    %423 = vmatpush1.bf16.msra.mxu0 0
    %424 = vmatprep.mubr.bf16.mxu0 0
    %425 = vmatmul.mubr.bf16.gmra.mrb[0].mxu0 %v320
    %v426 = vpop.f32.mrb[0].mxu0
    %v427 = vadd.f32 %v342, %v426
    %v428 = vpop.f32.mrb[0].mxu0
    %v429 = vpop.f32.mrb[0].mxu0
    %v430 = vadd.f32 %v342, %v429
    %v431 = vpop.f32.mrb[0].mxu0
    %432 = vdwg.mxu0
    %433 = vst [vmem:[#allocation10] sm:$0xff] %v427
    %434 = vst [vmem:[#allocation10 + $0x8] sm:$0xff] %v430
    // Predicated region
    $region46: #{tpu_custom_call.1} parent=1 // pred_check
      _
    $region47: #{tpu_custom_call.1} parent=1 // pred_check_branch
      %436 = sbr.rel (0) target = $region49
    $region48: #{tpu_custom_call.1} parent=1 // pred_region
      %s438 = ssub.s32 256, 256
      %439 = vsyncadd [#allocation4], %s438
      %s440 = sshll.u32 [#allocation10], 4
      %s441 = int_to_ptr.vmem [resolvable:$true] %s440
      %446 = dma.vmem_to_hbm [thread:$0]  %s441, 256, %s7, [#allocation4], 128, 128, 8
    $region49: #{tpu_custom_call.1} parent=1 // pred_fallthru
      _
    // Predicated region
    $region50: #{tpu_custom_call.1} parent=1 // pred_check
      _
    $region51: #{tpu_custom_call.1} parent=1 // pred_check_branch
      %448 = sbr.rel (0) target = $region53
    $region52: #{tpu_custom_call.1} parent=1 // pred_region
      %449 = dma.done [#allocation4], 256
    $region53: #{tpu_custom_call.1} parent=1 // pred_fallthru
      _
    %450 = vsyncpa [#allocation3], 1
    %451 = vsyncpa [#allocation6], 1
    %452 = vsyncpa [#allocation9], 1
    %453 = vsyncpa [#allocation4], 1

</llo_original>
